<compile_context>
chip_gen: v7x
topology: tpu7x:2x2x1
jax: 0.10.0
libtpu: 0.0.40
codegen_flags: <defaults>
</compile_context>

<pallas_src>
import functools

import jax
import jax.numpy as jnp
from jax.experimental import pallas as pl
from jax.experimental.pallas import tpu as pltpu

NUM_MODELS = 3            # number of task vectors
IN_DIM, HID_DIM, OUT_DIM = 32, 64, 16
BATCH = 8
OUT_PAD = 128             # lane-dense output width (>= OUT_DIM, multiple of 128)

# Parameter order == "layer" order for layer_wise_weights columns.
PARAM_KEYS = ("fc1.weight", "fc1.bias", "fc2.weight", "fc2.bias")


# ---------------------------------------------------------------------------
# Single fused kernel.
#
#   slab1 rows: [ W1_pre.T ; W1_tv0.T ; ... ; b1_pre ; b1_tv0 ; ... ]   ((1+M)*IN + (1+M), HID)
#   slab2 rows: [ W2_pre.T ; W2_tv0.T ; ... ; b2_pre ; b2_tv0 ; ... ]   ((1+M)*HID + (1+M), OUT_PAD)
#
#   x_aug = [x, c(i,0)*x ...]      -> h = ReLU(x_aug @ W1_block + b1_fused)   (K = (1+M)*IN)
#   h_aug = [h, c(i,2)*h ...]      -> y = h_aug @ W2_block + b2_fused         (K = (1+M)*HID)
# ---------------------------------------------------------------------------
def _fused_forward_kernel(num_models, in_dim, hid_dim, clamp,
                          coef_ref,       # SMEM (num_models, 4) f32 (unclamped)
                          x_ref,          # VMEM (B, IN)
                          slab1_ref,      # VMEM ((1+M)*IN  + (1+M), HID)
                          slab2_ref,      # VMEM ((1+M)*HID + (1+M), OUT_PAD)
                          out_ref):       # VMEM (B, OUT_PAD)
    m1 = num_models + 1
    kw1 = m1 * in_dim
    kw2 = m1 * hid_dim

    def coef(i, j):
        c = coef_ref[i, j]
        return jnp.clip(c, 0.0, 1.0) if clamp else c

    x = x_ref[...].astype(jnp.float32)                              # (B, IN)

    # ---- layer 1: merge folded into the contraction, K = (1+M)*IN ----
    x_aug = jnp.concatenate(
        [x] + [coef(i, 0) * x for i in range(num_models)], axis=1)  # (B, kw1)
    w1 = slab1_ref[pl.ds(0, kw1), :]                                # (kw1, HID)
    bias1 = slab1_ref[pl.ds(kw1, m1), :]                            # (1+M, HID)
    b1 = bias1[0:1, :]
    for i in range(num_models):                                     # tiny VPU fuse on (1, HID)
        b1 = b1 + coef(i, 1) * bias1[1 + i:2 + i, :]
    h = jnp.dot(x_aug, w1, preferred_element_type=jnp.float32) + b1
    h = jnp.maximum(h, 0.0)                                         # (B, HID)

    # ---- layer 2: merge folded into the contraction, K = (1+M)*HID ----
    h_aug = jnp.concatenate(
        [h] + [coef(i, 2) * h for i in range(num_models)], axis=1)  # (B, kw2)
    w2 = slab2_ref[pl.ds(0, kw2), :]                                # (kw2, OUT_PAD)
    bias2 = slab2_ref[pl.ds(kw2, m1), :]                            # (1+M, OUT_PAD)
    b2 = bias2[0:1, :]
    for i in range(num_models):
        b2 = b2 + coef(i, 3) * bias2[1 + i:2 + i, :]
    y = jnp.dot(h_aug, w2, preferred_element_type=jnp.float32) + b2
    out_ref[...] = y.astype(out_ref.dtype)                          # lane-dense (B, OUT_PAD) store


# ---------------------------------------------------------------------------
# One-time preparation (outside the hot forward path):
#   stack [pretrained ; task_vectors] per layer into one MXU-native slab,
#   with the bias rows appended; pad layer-2 slab to OUT_PAD lanes.
# ---------------------------------------------------------------------------
def prepare_merged_inputs(pretrained_sd, task_vectors, out_pad=OUT_PAD):
    def build_slab(wkey, bkey, pad_to):
        rows = [pretrained_sd[wkey].T] + [tv[wkey].T for tv in task_vectors]
        rows += [pretrained_sd[bkey].reshape(1, -1)] + \
                [tv[bkey].reshape(1, -1) for tv in task_vectors]
        slab = jnp.concatenate(rows, axis=0).astype(jnp.float32)
        if pad_to is not None and slab.shape[1] < pad_to:
            slab = jnp.pad(slab, ((0, 0), (0, pad_to - slab.shape[1])))
        return slab

    slab1 = build_slab("fc1.weight", "fc1.bias", None)      # ((1+M)*IN + (1+M), HID)
    slab2 = build_slab("fc2.weight", "fc2.bias", out_pad)    # ((1+M)*HID + (1+M), OUT_PAD)
    return slab1, slab2


# ---------------------------------------------------------------------------
# LayerWiseMergedModel.forward equivalent: a single pallas_call (4 inputs).
# ---------------------------------------------------------------------------
def layer_wise_merged_forward(slab1, slab2, layer_wise_weights, x,
                              clamp_weights=True, out_dim=OUT_DIM):
    num_models = layer_wise_weights.shape[0]
    batch, in_dim = x.shape
    hid_dim = slab1.shape[1]
    out_pad = slab2.shape[1]
    kw1 = (num_models + 1) * in_dim
    kw2 = (num_models + 1) * hid_dim

    coefs = layer_wise_weights.astype(jnp.float32)           # clamp happens in-kernel

    cost = pl.CostEstimate(
        flops=int(2 * batch * kw1 * hid_dim + 2 * batch * kw2 * out_pad),
        transcendentals=0,
        bytes_accessed=int(4 * (coefs.size + x.size + slab1.size + slab2.size
                                + batch * out_pad)),
    )

    vmem = pl.BlockSpec(memory_space=pltpu.MemorySpace.VMEM)
    smem = pl.BlockSpec(memory_space=pltpu.MemorySpace.SMEM)

    out_padded = pl.pallas_call(
        functools.partial(_fused_forward_kernel, num_models, in_dim, hid_dim,
                          clamp_weights),
        out_shape=jax.ShapeDtypeStruct((batch, out_pad), x.dtype),
        in_specs=[smem, vmem, vmem, vmem],
        out_specs=vmem,
        cost_estimate=cost,
    )(coefs, x, slab1, slab2)
    return out_padded[:, :out_dim]


# ---------------------------------------------------------------------------
# Pure-JAX reference for validation (PyTorch orientation, as in the module).
# ---------------------------------------------------------------------------
def reference_forward(pretrained_sd, task_vectors, layer_wise_weights, x,
                      clamp_weights=True):
    lww = jnp.clip(layer_wise_weights, 0.0, 1.0) if clamp_weights else layer_wise_weights
    merged = {}
    for j, k in enumerate(PARAM_KEYS):
        merged[k] = pretrained_sd[k] + sum(
            lww[i, j] * task_vectors[i][k] for i in range(len(task_vectors)))
    h = jnp.maximum(x @ merged["fc1.weight"].T + merged["fc1.bias"], 0.0)
    return h @ merged["fc2.weight"].T + merged["fc2.bias"]


if __name__ == "__main__":
    key = jax.random.PRNGKey(0)
    ks = jax.random.split(key, 16)

    # Deterministic "pretrained" MLP state dict (PyTorch convention: W is (out, in)).
    pretrained_sd = {
        "fc1.weight": 0.1 * jax.random.normal(ks[0], (HID_DIM, IN_DIM), jnp.float32),
        "fc1.bias":   0.1 * jax.random.normal(ks[1], (HID_DIM,), jnp.float32),
        "fc2.weight": 0.1 * jax.random.normal(ks[2], (OUT_DIM, HID_DIM), jnp.float32),
        "fc2.bias":   0.1 * jax.random.normal(ks[3], (OUT_DIM,), jnp.float32),
    }

    # Deterministic task vectors (one state-dict-of-deltas per "fine-tuned model").
    task_vectors = []
    for m in range(NUM_MODELS):
        base = 4 + 4 * m
        task_vectors.append({
            "fc1.weight": 0.05 * jax.random.normal(ks[base + 0], (HID_DIM, IN_DIM), jnp.float32),
            "fc1.bias":   0.05 * jax.random.normal(ks[base + 1], (HID_DIM,), jnp.float32),
            "fc2.weight": 0.05 * jax.random.normal(ks[base + 2], (OUT_DIM, HID_DIM), jnp.float32),
            "fc2.bias":   0.05 * jax.random.normal(ks[base + 3], (OUT_DIM,), jnp.float32),
        })

    num_layers = len(PARAM_KEYS)
    # Coefficients outside [0, 1] to exercise the in-kernel clamp path.
    layer_wise_weights = jax.random.uniform(
        key, (NUM_MODELS, num_layers), jnp.float32, minval=-0.5, maxval=1.5)

    x = jax.random.normal(jax.random.PRNGKey(42), (BATCH, IN_DIM), jnp.float32)

    # One-time prep (hoisted out of the forward path).
    slab1, slab2 = prepare_merged_inputs(pretrained_sd, task_vectors)
    slab1 = jax.block_until_ready(slab1)
    slab2 = jax.block_until_ready(slab2)

    out = layer_wise_merged_forward(slab1, slab2, layer_wise_weights, x,
                                    clamp_weights=True)
    out = jax.block_until_ready(out)

    ref = reference_forward(pretrained_sd, task_vectors, layer_wise_weights, x,
                            clamp_weights=True)
    assert out.shape == (BATCH, OUT_DIM)
    assert jnp.allclose(out, ref, atol=1e-4, rtol=1e-4), "Pallas output mismatch vs reference"

    print("KERNEL_OK")
</pallas_src>

<mosaic_0001>
module attributes {stable_mosaic.version = 11 : i64} {
  func.func @_fused_forward_kernel(%arg0: memref<3x4xf32, #tpu.memory_space<smem>>, %arg1: memref<8x32xf32, #tpu.memory_space<vmem>>, %arg2: memref<132x64xf32, #tpu.memory_space<vmem>>, %arg3: memref<260x128xf32, #tpu.memory_space<vmem>>, %arg4: memref<8x128xf32, #tpu.memory_space<vmem>>) attributes {dimension_semantics = [], scalar_prefetch = 0 : i64, scratch_operands = 0 : i64, tpu.core_type = #tpu.core_type<tc>} {
    %c0 = arith.constant 0 : index
    %c0_0 = arith.constant 0 : index
    %0 = vector.load %arg1[%c0, %c0_0] : memref<8x32xf32, #tpu.memory_space<vmem>>, vector<8x32xf32>
    %c0_1 = arith.constant 0 : index
    %c0_2 = arith.constant 0 : index
    %1 = memref.load %arg0[%c0_1, %c0_2] : memref<3x4xf32, #tpu.memory_space<smem>>
    %cst = arith.constant 0.000000e+00 : f32
    %cst_3 = arith.constant 1.000000e+00 : f32
    %2 = arith.maximumf %cst, %1 : f32
    %3 = arith.minimumf %cst_3, %2 : f32
    %4 = vector.broadcast %3 : f32 to vector<8x32xf32>
    %5 = arith.mulf %4, %0 : vector<8x32xf32>
    %c1 = arith.constant 1 : index
    %c0_4 = arith.constant 0 : index
    %6 = memref.load %arg0[%c1, %c0_4] : memref<3x4xf32, #tpu.memory_space<smem>>
    %cst_5 = arith.constant 0.000000e+00 : f32
    %cst_6 = arith.constant 1.000000e+00 : f32
    %7 = arith.maximumf %cst_5, %6 : f32
    %8 = arith.minimumf %cst_6, %7 : f32
    %9 = vector.broadcast %8 : f32 to vector<8x32xf32>
    %10 = arith.mulf %9, %0 : vector<8x32xf32>
    %c2 = arith.constant 2 : index
    %c0_7 = arith.constant 0 : index
    %11 = memref.load %arg0[%c2, %c0_7] : memref<3x4xf32, #tpu.memory_space<smem>>
    %cst_8 = arith.constant 0.000000e+00 : f32
    %cst_9 = arith.constant 1.000000e+00 : f32
    %12 = arith.maximumf %cst_8, %11 : f32
    %13 = arith.minimumf %cst_9, %12 : f32
    %14 = vector.broadcast %13 : f32 to vector<8x32xf32>
    %15 = arith.mulf %14, %0 : vector<8x32xf32>
    %16 = tpu.concatenate %0, %5, %10, %15 in 1 : vector<8x32xf32>, vector<8x32xf32>, vector<8x32xf32>, vector<8x32xf32> -> vector<8x128xf32>
    %c0_10 = arith.constant 0 : index
    %c0_11 = arith.constant 0 : index
    %17 = vector.load %arg2[%c0_10, %c0_11] : memref<132x64xf32, #tpu.memory_space<vmem>>, vector<128x64xf32>
    %c128 = arith.constant 128 : index
    %c0_12 = arith.constant 0 : index
    %18 = vector.load %arg2[%c128, %c0_12] : memref<132x64xf32, #tpu.memory_space<vmem>>, vector<4x64xf32>
    %19 = vector.extract_strided_slice %18 {offsets = [0, 0], sizes = [1, 64], strides = [1, 1]} : vector<4x64xf32> to vector<1x64xf32>
    %c0_13 = arith.constant 0 : index
    %c1_14 = arith.constant 1 : index
    %20 = memref.load %arg0[%c0_13, %c1_14] : memref<3x4xf32, #tpu.memory_space<smem>>
    %cst_15 = arith.constant 0.000000e+00 : f32
    %cst_16 = arith.constant 1.000000e+00 : f32
    %21 = arith.maximumf %cst_15, %20 : f32
    %22 = arith.minimumf %cst_16, %21 : f32
    %23 = vector.extract_strided_slice %18 {offsets = [1, 0], sizes = [1, 64], strides = [1, 1]} : vector<4x64xf32> to vector<1x64xf32>
    %24 = vector.broadcast %22 : f32 to vector<1x64xf32>
    %25 = arith.mulf %24, %23 : vector<1x64xf32>
    %26 = arith.addf %19, %25 : vector<1x64xf32>
    %c1_17 = arith.constant 1 : index
    %c1_18 = arith.constant 1 : index
    %27 = memref.load %arg0[%c1_17, %c1_18] : memref<3x4xf32, #tpu.memory_space<smem>>
    %cst_19 = arith.constant 0.000000e+00 : f32
    %cst_20 = arith.constant 1.000000e+00 : f32
    %28 = arith.maximumf %cst_19, %27 : f32
    %29 = arith.minimumf %cst_20, %28 : f32
    %30 = vector.extract_strided_slice %18 {offsets = [2, 0], sizes = [1, 64], strides = [1, 1]} : vector<4x64xf32> to vector<1x64xf32>
    %31 = vector.broadcast %29 : f32 to vector<1x64xf32>
    %32 = arith.mulf %31, %30 : vector<1x64xf32>
    %33 = arith.addf %26, %32 : vector<1x64xf32>
    %c2_21 = arith.constant 2 : index
    %c1_22 = arith.constant 1 : index
    %34 = memref.load %arg0[%c2_21, %c1_22] : memref<3x4xf32, #tpu.memory_space<smem>>
    %cst_23 = arith.constant 0.000000e+00 : f32
    %cst_24 = arith.constant 1.000000e+00 : f32
    %35 = arith.maximumf %cst_23, %34 : f32
    %36 = arith.minimumf %cst_24, %35 : f32
    %37 = vector.extract_strided_slice %18 {offsets = [3, 0], sizes = [1, 64], strides = [1, 1]} : vector<4x64xf32> to vector<1x64xf32>
    %38 = vector.broadcast %36 : f32 to vector<1x64xf32>
    %39 = arith.mulf %38, %37 : vector<1x64xf32>
    %40 = arith.addf %33, %39 : vector<1x64xf32>
    %cst_25 = arith.constant dense<0.000000e+00> : vector<8x64xf32>
    %41 = tpu.matmul %16, %17, %cst_25 {dimension_numbers = #tpu.dot_dimension_numbers<[1], [0], [0], [1], [0, 0, 1, 1], [], []>} : vector<8x128xf32>, vector<128x64xf32>, vector<8x64xf32> -> vector<8x64xf32>
    %42 = vector.broadcast %40 : vector<1x64xf32> to vector<8x64xf32>
    %43 = arith.addf %41, %42 : vector<8x64xf32>
    %cst_26 = arith.constant 0.000000e+00 : f32
    %44 = vector.broadcast %cst_26 : f32 to vector<8x64xf32>
    %45 = arith.maximumf %43, %44 : vector<8x64xf32>
    %c0_27 = arith.constant 0 : index
    %c2_28 = arith.constant 2 : index
    %46 = memref.load %arg0[%c0_27, %c2_28] : memref<3x4xf32, #tpu.memory_space<smem>>
    %cst_29 = arith.constant 0.000000e+00 : f32
    %cst_30 = arith.constant 1.000000e+00 : f32
    %47 = arith.maximumf %cst_29, %46 : f32
    %48 = arith.minimumf %cst_30, %47 : f32
    %49 = vector.broadcast %48 : f32 to vector<8x64xf32>
    %50 = arith.mulf %49, %45 : vector<8x64xf32>
    %c1_31 = arith.constant 1 : index
    %c2_32 = arith.constant 2 : index
    %51 = memref.load %arg0[%c1_31, %c2_32] : memref<3x4xf32, #tpu.memory_space<smem>>
    %cst_33 = arith.constant 0.000000e+00 : f32
    %cst_34 = arith.constant 1.000000e+00 : f32
    %52 = arith.maximumf %cst_33, %51 : f32
    %53 = arith.minimumf %cst_34, %52 : f32
    %54 = vector.broadcast %53 : f32 to vector<8x64xf32>
    %55 = arith.mulf %54, %45 : vector<8x64xf32>
    %c2_35 = arith.constant 2 : index
    %c2_36 = arith.constant 2 : index
    %56 = memref.load %arg0[%c2_35, %c2_36] : memref<3x4xf32, #tpu.memory_space<smem>>
    %cst_37 = arith.constant 0.000000e+00 : f32
    %cst_38 = arith.constant 1.000000e+00 : f32
    %57 = arith.maximumf %cst_37, %56 : f32
    %58 = arith.minimumf %cst_38, %57 : f32
    %59 = vector.broadcast %58 : f32 to vector<8x64xf32>
    %60 = arith.mulf %59, %45 : vector<8x64xf32>
    %61 = tpu.concatenate %45, %50, %55, %60 in 1 : vector<8x64xf32>, vector<8x64xf32>, vector<8x64xf32>, vector<8x64xf32> -> vector<8x256xf32>
    %c0_39 = arith.constant 0 : index
    %c0_40 = arith.constant 0 : index
    %62 = vector.load %arg3[%c0_39, %c0_40] : memref<260x128xf32, #tpu.memory_space<vmem>>, vector<256x128xf32>
    %c256 = arith.constant 256 : index
    %c0_41 = arith.constant 0 : index
    %63 = vector.load %arg3[%c256, %c0_41] : memref<260x128xf32, #tpu.memory_space<vmem>>, vector<4x128xf32>
    %64 = vector.extract_strided_slice %63 {offsets = [0, 0], sizes = [1, 128], strides = [1, 1]} : vector<4x128xf32> to vector<1x128xf32>
    %c0_42 = arith.constant 0 : index
    %c3 = arith.constant 3 : index
    %65 = memref.load %arg0[%c0_42, %c3] : memref<3x4xf32, #tpu.memory_space<smem>>
    %cst_43 = arith.constant 0.000000e+00 : f32
    %cst_44 = arith.constant 1.000000e+00 : f32
    %66 = arith.maximumf %cst_43, %65 : f32
    %67 = arith.minimumf %cst_44, %66 : f32
    %68 = vector.extract_strided_slice %63 {offsets = [1, 0], sizes = [1, 128], strides = [1, 1]} : vector<4x128xf32> to vector<1x128xf32>
    %69 = vector.broadcast %67 : f32 to vector<1x128xf32>
    %70 = arith.mulf %69, %68 : vector<1x128xf32>
    %71 = arith.addf %64, %70 : vector<1x128xf32>
    %c1_45 = arith.constant 1 : index
    %c3_46 = arith.constant 3 : index
    %72 = memref.load %arg0[%c1_45, %c3_46] : memref<3x4xf32, #tpu.memory_space<smem>>
    %cst_47 = arith.constant 0.000000e+00 : f32
    %cst_48 = arith.constant 1.000000e+00 : f32
    %73 = arith.maximumf %cst_47, %72 : f32
    %74 = arith.minimumf %cst_48, %73 : f32
    %75 = vector.extract_strided_slice %63 {offsets = [2, 0], sizes = [1, 128], strides = [1, 1]} : vector<4x128xf32> to vector<1x128xf32>
    %76 = vector.broadcast %74 : f32 to vector<1x128xf32>
    %77 = arith.mulf %76, %75 : vector<1x128xf32>
    %78 = arith.addf %71, %77 : vector<1x128xf32>
    %c2_49 = arith.constant 2 : index
    %c3_50 = arith.constant 3 : index
    %79 = memref.load %arg0[%c2_49, %c3_50] : memref<3x4xf32, #tpu.memory_space<smem>>
    %cst_51 = arith.constant 0.000000e+00 : f32
    %cst_52 = arith.constant 1.000000e+00 : f32
    %80 = arith.maximumf %cst_51, %79 : f32
    %81 = arith.minimumf %cst_52, %80 : f32
    %82 = vector.extract_strided_slice %63 {offsets = [3, 0], sizes = [1, 128], strides = [1, 1]} : vector<4x128xf32> to vector<1x128xf32>
    %83 = vector.broadcast %81 : f32 to vector<1x128xf32>
    %84 = arith.mulf %83, %82 : vector<1x128xf32>
    %85 = arith.addf %78, %84 : vector<1x128xf32>
    %cst_53 = arith.constant dense<0.000000e+00> : vector<8x128xf32>
    %86 = tpu.matmul %61, %62, %cst_53 {dimension_numbers = #tpu.dot_dimension_numbers<[1], [0], [0], [1], [0, 0, 1, 1], [], []>} : vector<8x256xf32>, vector<256x128xf32>, vector<8x128xf32> -> vector<8x128xf32>
    %87 = vector.broadcast %85 : vector<1x128xf32> to vector<8x128xf32>
    %88 = arith.addf %86, %87 : vector<8x128xf32>
    %c0_54 = arith.constant 0 : index
    %c0_55 = arith.constant 0 : index
    %89 = vector.load %arg4[%c0_54, %c0_55] : memref<8x128xf32, #tpu.memory_space<vmem>>, vector<8x128xf32>
    tpu.vector_store %arg4[%c0_54, %c0_55], %88 {strides = array<i32>} : memref<8x128xf32, #tpu.memory_space<vmem>>, vector<8x128xf32>,
    return
  }
}

</mosaic_0001>

<llo_original>
// kernel: tpu_custom_call.1
$region0: #{tpu_custom_call.1}
  #allocation0 [shape = 'u32[]', space=smem, size = 0x4, offset = 0x4, fixed_abs, tag = 'smem constant byte address 0x4 - core index']
  #allocation1 [shape = 'u32[144,128]{1,0:T(1,128)}', space=vmem, size = 0x12000, scoped, tag = 'internal scratch']
  %s0 = inlined_call_operand.hbm [shape: f32[3,4], index: 0, kind: input, shape index: {}]
  %s1 = inlined_call_operand.vmem [shape: f32[8,32], index: 1, kind: input, shape index: {}]
  %s2 = inlined_call_operand.vmem [shape: f32[132,64], index: 2, kind: input, shape index: {}]
  %s3 = inlined_call_operand.vmem [shape: f32[260,128], index: 3, kind: input, shape index: {}]
  %s4 = inlined_call_operand.hbm [shape: f32[8,128], index: 4, kind: output, shape index: {}]
  %s5 = sld [smem:[#allocation0]]
  $region30: #{tpu_custom_call.1} parent=0
    _
  %s7 = ssub.s32 1, %s5
  %s8 = scalar_select 0, %s7, %s5
  $region1: #{tpu_custom_call.1} parent=0
    #allocation2 [shape = 'u8[2048]{0}', space=smem, size = 0x800, scoped, tag = 'input window, operand 0, single buffered']
    #allocation3 [shape = 's32[1]{0}', space=sflag, size = 0x4, scoped, tag = 'scoped memory for tpu_custom_call.1']
    #allocation4 [shape = 's32[1]{0}', space=sflag, size = 0x4, scoped, tag = 'scoped memory for tpu_custom_call.1']
    #allocation5 [shape = 'u8[4096]{0}', space=vmem, size = 0x1000, scoped, tag = 'output window, operand 0, single buffered']
    %9 = vsyncpa [#allocation4], 0
    %10 = vsyncpa [#allocation3], 0
    // Predicated region
    $region2: #{tpu_custom_call.1} parent=1 // pred_check
      _
    $region3: #{tpu_custom_call.1} parent=1 // pred_check_branch
      %12 = sbr.rel (0) target = $region5
    $region4: #{tpu_custom_call.1} parent=1 // pred_region
      %s14 = ssub.s32 64, 64
      %15 = vsyncadd [#allocation4], %s14
      %18 = dma.hbm_to_smem %s0, 64, [#allocation2], [#allocation4]
    $region5: #{tpu_custom_call.1} parent=1 // pred_fallthru
      _
    // Predicated region
    $region6: #{tpu_custom_call.1} parent=1 // pred_check
      _
    $region7: #{tpu_custom_call.1} parent=1 // pred_check_branch
      %20 = sbr.rel (0) target = $region9
    $region8: #{tpu_custom_call.1} parent=1 // pred_region
      _
    $region9: #{tpu_custom_call.1} parent=1 // pred_fallthru
      _
    // Predicated region
    $region10: #{tpu_custom_call.1} parent=1 // pred_check
      _
    $region11: #{tpu_custom_call.1} parent=1 // pred_check_branch
      %22 = sbr.rel (0) target = $region13
    $region12: #{tpu_custom_call.1} parent=1 // pred_region
      _
    $region13: #{tpu_custom_call.1} parent=1 // pred_fallthru
      _
    // Predicated region
    $region14: #{tpu_custom_call.1} parent=1 // pred_check
      _
    $region15: #{tpu_custom_call.1} parent=1 // pred_check_branch
      %24 = sbr.rel (0) target = $region17
    $region16: #{tpu_custom_call.1} parent=1 // pred_region
      _
    $region17: #{tpu_custom_call.1} parent=1 // pred_fallthru
      _
    // Predicated region
    $region18: #{tpu_custom_call.1} parent=1 // pred_check
      _
    $region19: #{tpu_custom_call.1} parent=1 // pred_check_branch
      %26 = sbr.rel (0) target = $region21
    $region20: #{tpu_custom_call.1} parent=1 // pred_region
      %27 = dma.done [#allocation4], 64
    $region21: #{tpu_custom_call.1} parent=1 // pred_fallthru
      _
    %28 = sfence
    %v29 = vld [vmem:[%s1] sm:$0xff]
    %s30 = sld [smem:[#allocation2]]
    %s31 = smax.f32 %s30, 0.0
    %s32 = smin.f32 %s31, 1.0
    %v33 = vstv %s32
    %v34 = vmul.f32 %v33, %v29
    %s35 = sld [smem:[#allocation2 + $0x80]]
    %s36 = smax.f32 %s35, 0.0
    %s37 = smin.f32 %s36, 1.0
    %v38 = vstv %s37
    %v39 = vmul.f32 %v38, %v29
    %s40 = sld [smem:[#allocation2 + $0x100]]
    %s41 = smax.f32 %s40, 0.0
    %s42 = smin.f32 %s41, 1.0
    %v43 = vstv %s42
    %v44 = vmul.f32 %v43, %v29
    %46 = vrot.lane.b32.xlu0 %v34, 32
    %v47 = vpop.permute.xlu0 %46
    %50 = vrot.lane.b32.xlu0 %v39, 64
    %v51 = vpop.permute.xlu0 %50
    %54 = vrot.lane.b32.xlu0 %v44, 96
    %v55 = vpop.permute.xlu0 %54
    %vm57 = vcmask 261120
    %v58 = vsel %vm57, %v29, %v47
    %vm59 = vcmask 523264
    %v60 = vsel %vm59, %v58, %v51
    %vm61 = vcmask 785408
    %v62 = vsel %vm61, %v60, %v55
    %v63 = vld [vmem:[%s2] sm:$0xff]
    %v64 = vld [vmem:[%s2 + $0x8] sm:$0xff]
    %v65 = vld [vmem:[%s2 + $0x10] sm:$0xff]
    %v66 = vld [vmem:[%s2 + $0x18] sm:$0xff]
    %v67 = vld [vmem:[%s2 + $0x20] sm:$0xff]
    %v68 = vld [vmem:[%s2 + $0x28] sm:$0xff]
    %v69 = vld [vmem:[%s2 + $0x30] sm:$0xff]
    %v70 = vld [vmem:[%s2 + $0x38] sm:$0xff]
    %v71 = vld [vmem:[%s2 + $0x40] sm:$0xff]
    %v72 = vld [vmem:[%s2 + $0x48] sm:$0xff]
    %v73 = vld [vmem:[%s2 + $0x50] sm:$0xff]
    %v74 = vld [vmem:[%s2 + $0x58] sm:$0xff]
    %v75 = vld [vmem:[%s2 + $0x60] sm:$0xff]
    %v76 = vld [vmem:[%s2 + $0x68] sm:$0xff]
    %v77 = vld [vmem:[%s2 + $0x70] sm:$0xff]
    %v78 = vld [vmem:[%s2 + $0x78] sm:$0xff]
    %v79 = vld [vmem:[%s2 + $0x80] sm:$0xf]
    %s80 = sld [smem:[#allocation2 + $0x1]]
    %s81 = smax.f32 %s80, 0.0
    %s82 = smin.f32 %s81, 1.0
    %v83 = vstv %s82
    %v84 = vmul.f32 %v83, %v79
    %v86 = vrot.slane %v84, 1
    %v88 = vadd.f32 %v79, %v86
    %s89 = sld [smem:[#allocation2 + $0x81]]
    %s90 = smax.f32 %s89, 0.0
    %s91 = smin.f32 %s90, 1.0
    %v92 = vstv %s91
    %v93 = vmul.f32 %v92, %v79
    %v95 = vrot.slane %v93, 2
    %v97 = vadd.f32 %v88, %v95
    %s98 = sld [smem:[#allocation2 + $0x101]]
    %s99 = smax.f32 %s98, 0.0
    %s100 = smin.f32 %s99, 1.0
    %v101 = vstv %s100
    %v102 = vmul.f32 %v101, %v79
    %v104 = vrot.slane %v102, 3
    %v106 = vadd.f32 %v97, %v104
    %v107 = vlaneseq
    %v108 = vshrl.u32 %v107, 7
    %v109 = vsub.s32 0, %v108
    %v110 = vrot.slane %v106, %v109
    %111 = vmatprep.subr.mxu0 0.0
    %112 = vmatpush1.msra.mxu0 %v63
    %113 = vmatprep.subr.mxu0 0.0
    %114 = vmatpush1.msra.mxu0 %v64
    %115 = vmatprep.subr.mxu0 0.0
    %116 = vmatpush1.msra.mxu0 %v65
    %117 = vmatprep.subr.mxu0 0.0
    %118 = vmatpush1.msra.mxu0 %v66
    %119 = vmatprep.subr.mxu0 0.0
    %120 = vmatpush1.msra.mxu0 %v67
    %121 = vmatprep.subr.mxu0 0.0
    %122 = vmatpush1.msra.mxu0 %v68
    %123 = vmatprep.subr.mxu0 0.0
    %124 = vmatpush1.msra.mxu0 %v69
    %125 = vmatprep.subr.mxu0 0.0
    %126 = vmatpush1.msra.mxu0 %v70
    %127 = vmatprep.subr.mxu0 0.0
    %128 = vmatpush1.msra.mxu0 %v71
    %129 = vmatprep.subr.mxu0 0.0
    %130 = vmatpush1.msra.mxu0 %v72
    %131 = vmatprep.subr.mxu0 0.0
    %132 = vmatpush1.msra.mxu0 %v73
    %133 = vmatprep.subr.mxu0 0.0
    %134 = vmatpush1.msra.mxu0 %v74
    %135 = vmatprep.subr.mxu0 0.0
    %136 = vmatpush1.msra.mxu0 %v75
    %137 = vmatprep.subr.mxu0 0.0
    %138 = vmatpush1.msra.mxu0 %v76
    %139 = vmatprep.subr.mxu0 0.0
    %140 = vmatpush1.msra.mxu0 %v77
    %141 = vmatprep.subr.mxu0 0.0
    %142 = vmatpush1.msra.mxu0 %v78
    %143 = vmatprep.subr.mxu0 0.0
    %144 = vmatpush1.msra.mxu0 0.0
    %145 = vmatprep.subr.mxu0 0.0
    %146 = vmatpush1.msra.mxu0 0.0
    %147 = vmatprep.subr.mxu0 0.0
    %148 = vmatpush1.msra.mxu0 0.0
    %149 = vmatprep.subr.mxu0 0.0
    %150 = vmatpush1.msra.mxu0 0.0
    %151 = vmatprep.subr.mxu0 0.0
    %152 = vmatpush1.msra.mxu0 0.0
    %153 = vmatprep.subr.mxu0 0.0
    %154 = vmatpush1.msra.mxu0 0.0
    %155 = vmatprep.subr.mxu0 0.0
    %156 = vmatpush1.msra.mxu0 0.0
    %157 = vmatprep.subr.mxu0 0.0
    %158 = vmatpush1.msra.mxu0 0.0
    %159 = vmatprep.subr.mxu0 0.0
    %160 = vmatpush1.msra.mxu0 0.0
    %161 = vmatprep.subr.mxu0 0.0
    %162 = vmatpush1.msra.mxu0 0.0
    %163 = vmatprep.subr.mxu0 0.0
    %164 = vmatpush1.msra.mxu0 0.0
    %165 = vmatprep.subr.mxu0 0.0
    %166 = vmatpush1.msra.mxu0 0.0
    %167 = vmatprep.subr.mxu0 0.0
    %168 = vmatpush1.msra.mxu0 0.0
    %169 = vmatprep.subr.mxu0 0.0
    %170 = vmatpush1.msra.mxu0 0.0
    %171 = vmatprep.subr.mxu0 0.0
    %172 = vmatpush1.msra.mxu0 0.0
    %173 = vmatprep.subr.mxu0 0.0
    %174 = vmatpush1.msra.mxu0 0.0
    %175 = vmatprep.mubr.f32.mxu0 0.0
    %176 = vmatmul.mubr.f32.gmra.mrb[0].mxu0 %v62
    %v177 = vpop.f32.mrb[0].mxu0
    %v178 = vadd.f32 %v110, %v177
    %v179 = vpop.f32.mrb[0].mxu0
    %180 = vdwg.mxu0
    %v181 = vmax.f32 %v178, 0.0
    %s182 = sld [smem:[#allocation2 + $0x2]]
    %s183 = smax.f32 %s182, 0.0
    %s184 = smin.f32 %s183, 1.0
    %v185 = vstv %s184
    %v186 = vmul.f32 %v185, %v181
    %s187 = sld [smem:[#allocation2 + $0x82]]
    %s188 = smax.f32 %s187, 0.0
    %s189 = smin.f32 %s188, 1.0
    %v190 = vstv %s189
    %v191 = vmul.f32 %v190, %v181
    %s192 = sld [smem:[#allocation2 + $0x102]]
    %s193 = smax.f32 %s192, 0.0
    %s194 = smin.f32 %s193, 1.0
    %v195 = vstv %s194
    %v196 = vmul.f32 %v195, %v181
    %198 = vrot.lane.b32.xlu0 %v186, 64
    %v199 = vpop.permute.xlu0 %198
    %202 = vrot.lane.b32.xlu0 %v196, 64
    %v203 = vpop.permute.xlu0 %202
    %v205 = vsel %vm59, %v181, %v199
    %v206 = vsel %vm59, %v191, %v203
    %v207 = vld [vmem:[%s3] sm:$0xff]
    %v208 = vld [vmem:[%s3 + $0x8] sm:$0xff]
    %v209 = vld [vmem:[%s3 + $0x10] sm:$0xff]
    %v210 = vld [vmem:[%s3 + $0x18] sm:$0xff]
    %v211 = vld [vmem:[%s3 + $0x20] sm:$0xff]
    %v212 = vld [vmem:[%s3 + $0x28] sm:$0xff]
    %v213 = vld [vmem:[%s3 + $0x30] sm:$0xff]
    %v214 = vld [vmem:[%s3 + $0x38] sm:$0xff]
    %v215 = vld [vmem:[%s3 + $0x40] sm:$0xff]
    %v216 = vld [vmem:[%s3 + $0x48] sm:$0xff]
    %v217 = vld [vmem:[%s3 + $0x50] sm:$0xff]
    %v218 = vld [vmem:[%s3 + $0x58] sm:$0xff]
    %v219 = vld [vmem:[%s3 + $0x60] sm:$0xff]
    %v220 = vld [vmem:[%s3 + $0x68] sm:$0xff]
    %v221 = vld [vmem:[%s3 + $0x70] sm:$0xff]
    %v222 = vld [vmem:[%s3 + $0x78] sm:$0xff]
    %v223 = vld [vmem:[%s3 + $0x80] sm:$0xff]
    %v224 = vld [vmem:[%s3 + $0x88] sm:$0xff]
    %v225 = vld [vmem:[%s3 + $0x90] sm:$0xff]
    %v226 = vld [vmem:[%s3 + $0x98] sm:$0xff]
    %v227 = vld [vmem:[%s3 + $0xa0] sm:$0xff]
    %v228 = vld [vmem:[%s3 + $0xa8] sm:$0xff]
    %v229 = vld [vmem:[%s3 + $0xb0] sm:$0xff]
    %v230 = vld [vmem:[%s3 + $0xb8] sm:$0xff]
    %v231 = vld [vmem:[%s3 + $0xc0] sm:$0xff]
    %v232 = vld [vmem:[%s3 + $0xc8] sm:$0xff]
    %v233 = vld [vmem:[%s3 + $0xd0] sm:$0xff]
    %v234 = vld [vmem:[%s3 + $0xd8] sm:$0xff]
    %v235 = vld [vmem:[%s3 + $0xe0] sm:$0xff]
    %v236 = vld [vmem:[%s3 + $0xe8] sm:$0xff]
    %v237 = vld [vmem:[%s3 + $0xf0] sm:$0xff]
    %v238 = vld [vmem:[%s3 + $0xf8] sm:$0xff]
    %v239 = vld [vmem:[%s3 + $0x100] sm:$0xf]
    %s240 = sld [smem:[#allocation2 + $0x3]]
    %s241 = smax.f32 %s240, 0.0
    %s242 = smin.f32 %s241, 1.0
    %v243 = vstv %s242
    %v244 = vmul.f32 %v243, %v239
    %v246 = vrot.slane %v244, 1
    %v248 = vadd.f32 %v239, %v246
    %s249 = sld [smem:[#allocation2 + $0x83]]
    %s250 = smax.f32 %s249, 0.0
    %s251 = smin.f32 %s250, 1.0
    %v252 = vstv %s251
    %v253 = vmul.f32 %v252, %v239
    %v255 = vrot.slane %v253, 2
    %v257 = vadd.f32 %v248, %v255
    %s258 = sld [smem:[#allocation2 + $0x103]]
    %s259 = smax.f32 %s258, 0.0
    %s260 = smin.f32 %s259, 1.0
    %v261 = vstv %s260
    %v262 = vmul.f32 %v261, %v239
    %v264 = vrot.slane %v262, 3
    %v266 = vadd.f32 %v257, %v264
    %v267 = vlaneseq
    %v268 = vshrl.u32 %v267, 7
    %v269 = vsub.s32 0, %v268
    %v270 = vrot.slane %v266, %v269
    %271 = vmatprep.subr.mxu0 0.0
    %272 = vmatpush1.msra.mxu0 %v207
    %273 = vmatprep.subr.mxu0 0.0
    %274 = vmatpush1.msra.mxu0 %v208
    %275 = vmatprep.subr.mxu0 0.0
    %276 = vmatpush1.msra.mxu0 %v209
    %277 = vmatprep.subr.mxu0 0.0
    %278 = vmatpush1.msra.mxu0 %v210
    %279 = vmatprep.subr.mxu0 0.0
    %280 = vmatpush1.msra.mxu0 %v211
    %281 = vmatprep.subr.mxu0 0.0
    %282 = vmatpush1.msra.mxu0 %v212
    %283 = vmatprep.subr.mxu0 0.0
    %284 = vmatpush1.msra.mxu0 %v213
    %285 = vmatprep.subr.mxu0 0.0
    %286 = vmatpush1.msra.mxu0 %v214
    %287 = vmatprep.subr.mxu0 0.0
    %288 = vmatpush1.msra.mxu0 %v215
    %289 = vmatprep.subr.mxu0 0.0
    %290 = vmatpush1.msra.mxu0 %v216
    %291 = vmatprep.subr.mxu0 0.0
    %292 = vmatpush1.msra.mxu0 %v217
    %293 = vmatprep.subr.mxu0 0.0
    %294 = vmatpush1.msra.mxu0 %v218
    %295 = vmatprep.subr.mxu0 0.0
    %296 = vmatpush1.msra.mxu0 %v219
    %297 = vmatprep.subr.mxu0 0.0
    %298 = vmatpush1.msra.mxu0 %v220
    %299 = vmatprep.subr.mxu0 0.0
    %300 = vmatpush1.msra.mxu0 %v221
    %301 = vmatprep.subr.mxu0 0.0
    %302 = vmatpush1.msra.mxu0 %v222
    %303 = vmatprep.subr.mxu0 0.0
    %304 = vmatpush1.msra.mxu0 %v223
    %305 = vmatprep.subr.mxu0 0.0
    %306 = vmatpush1.msra.mxu0 %v224
    %307 = vmatprep.subr.mxu0 0.0
    %308 = vmatpush1.msra.mxu0 %v225
    %309 = vmatprep.subr.mxu0 0.0
    %310 = vmatpush1.msra.mxu0 %v226
    %311 = vmatprep.subr.mxu0 0.0
    %312 = vmatpush1.msra.mxu0 %v227
    %313 = vmatprep.subr.mxu0 0.0
    %314 = vmatpush1.msra.mxu0 %v228
    %315 = vmatprep.subr.mxu0 0.0
    %316 = vmatpush1.msra.mxu0 %v229
    %317 = vmatprep.subr.mxu0 0.0
    %318 = vmatpush1.msra.mxu0 %v230
    %319 = vmatprep.subr.mxu0 0.0
    %320 = vmatpush1.msra.mxu0 %v231
    %321 = vmatprep.subr.mxu0 0.0
    %322 = vmatpush1.msra.mxu0 %v232
    %323 = vmatprep.subr.mxu0 0.0
    %324 = vmatpush1.msra.mxu0 %v233
    %325 = vmatprep.subr.mxu0 0.0
    %326 = vmatpush1.msra.mxu0 %v234
    %327 = vmatprep.subr.mxu0 0.0
    %328 = vmatpush1.msra.mxu0 %v235
    %329 = vmatprep.subr.mxu0 0.0
    %330 = vmatpush1.msra.mxu0 %v236
    %331 = vmatprep.subr.mxu0 0.0
    %332 = vmatpush1.msra.mxu0 %v237
    %333 = vmatprep.subr.mxu0 0.0
    %334 = vmatpush1.msra.mxu0 %v238
    %335 = vmatprep.mubr.f32.mxu0 %v206
    %336 = vmatmul.mubr.f32.gmra.mrb[0].mxu0 %v205
    %v337 = vpop.f32.mrb[0].mxu0
    %v338 = vadd.f32 %v270, %v337
    %v339 = vpop.f32.mrb[0].mxu0
    %340 = vdwg.mxu0
    %341 = vst [vmem:[#allocation5] sm:$0xff] %v338
    // Predicated region
    $region22: #{tpu_custom_call.1} parent=1 // pred_check
      _
    $region23: #{tpu_custom_call.1} parent=1 // pred_check_branch
      %343 = sbr.rel (0) target = $region25
    $region24: #{tpu_custom_call.1} parent=1 // pred_region
      %s345 = ssub.s32 128, 128
      %346 = vsyncadd [#allocation3], %s345
      %s348 = sshll.u32 [#allocation5], 4
      %s349 = int_to_ptr.vmem [resolvable:$true] %s348
      %351 = dma.vmem_to_hbm [thread:$0]  %s349, 128, %s4, [#allocation3]
    $region25: #{tpu_custom_call.1} parent=1 // pred_fallthru
      _
    // Predicated region
    $region26: #{tpu_custom_call.1} parent=1 // pred_check
      _
    $region27: #{tpu_custom_call.1} parent=1 // pred_check_branch
      %353 = sbr.rel (0) target = $region29
    $region28: #{tpu_custom_call.1} parent=1 // pred_region
      %354 = dma.done [#allocation3], 128
    $region29: #{tpu_custom_call.1} parent=1 // pred_fallthru
      _
    %355 = vsyncpa [#allocation3], 1
    %356 = vsyncpa [#allocation4], 1

</llo_original>
